<compile_context>
chip_gen: v7x
topology: tpu7x:2x2x1
jax: 0.10.0
libtpu: 0.0.40
codegen_flags: <defaults>
</compile_context>

<pallas_src>
import math
import functools

import jax
import jax.numpy as jnp
from jax.experimental import pallas as pl
from jax.experimental.pallas import tpu as pltpu


def _round_up(x, m):
    return ((x + m - 1) // m) * m


def _cprelu_col_kernel(x_ref, w_ref, o_ref, *, pos_scale, bias):
    """Per-channel slopes: (BR, 1) f32 column (already * 1/post_stdv)."""
    x = x_ref[...].astype(jnp.float32)                    # (BR, BC)
    scale = jnp.where(x >= 0, pos_scale, w_ref[...])      # broadcast over lanes
    o_ref[...] = (x * scale - bias).astype(o_ref.dtype)


def _cprelu_scalar_kernel(x_ref, w_ref, o_ref, *, pos_scale, bias):
    """Single slope (already * 1/post_stdv) held in SMEM."""
    x = x_ref[...].astype(jnp.float32)                    # (BR, BC)
    scale = jnp.where(x >= 0, pos_scale, w_ref[0])
    o_ref[...] = (x * scale - bias).astype(o_ref.dtype)


def cprelu(x_nchw, weight, init=0.25, *, block_bytes=4 << 20, donate_x=False):
    """x_nchw: (N, C, H, W). weight: (1,) or (C,) PReLU slopes."""
    N, C, H, W = x_nchw.shape
    num_parameters = weight.shape[0]
    assert num_parameters in (1, C), "PReLU weight must have 1 or C parameters"

    # Fixed whitening constants (depend only on `init`, like the PyTorch module).
    post_mean = float((1.0 - init) / math.sqrt(2.0 * math.pi))
    post_ex2 = (1.0 + init ** 2) / 2.0
    post_stdv = math.sqrt(post_ex2 - post_mean ** 2)
    inv_post_stdv = float(1.0 / post_stdv)
    bias = float(post_mean * inv_post_stdv)

    rows, hw = N * C, H * W
    x2d = x_nchw.reshape(rows, hw)
    itemsize = x2d.dtype.itemsize
    # dtype-aware minimum sublane multiple: f32 -> 8, bf16 -> 16, int8/fp8 -> 32.
    sublane = {4: 8, 2: 16, 1: 32}.get(itemsize, 8)

    rows_t = _round_up(rows, sublane)
    hw_t = _round_up(hw, 128)

    # Block sizing: prefer full-width (lane-dense, contiguous DMA) blocks;
    # only fall back to column tiling for very large H*W.
    if hw_t * sublane * itemsize <= block_bytes:
        bc = hw_t
        br = (block_bytes // (bc * itemsize)) // sublane * sublane
        br = max(sublane, min(br, rows_t))
    else:
        br = sublane
        bc = min(hw_t, max(128, (block_bytes // (br * itemsize)) // 128 * 128))

    grid = (pl.cdiv(rows, br), pl.cdiv(hw, bc))
    # v7x has 2 TensorCores: if the grid collapsed to a single block but there
    # is more than one sublane of rows, split rows 2-way so both cores work.
    if grid == (1, 1) and rows > sublane:
        br = _round_up(-(-rows // 2), sublane)
        grid = (pl.cdiv(rows, br), pl.cdiv(hw, bc))

    # Advisory cost: count padded traffic plus the weight stream.
    padded_elems = grid[0] * br * grid[1] * bc
    w_bytes = grid[0] * grid[1] * br * 4 if num_parameters > 1 else 4
    cost = pl.CostEstimate(
        flops=3 * rows * hw,
        transcendentals=0,
        bytes_accessed=2 * padded_elems * itemsize + w_bytes,
    )
    cparams = pltpu.CompilerParams(
        dimension_semantics=("parallel", "parallel"),
        vmem_limit_bytes=32 << 20,   # explicit: covers 4 MiB x/out blocks + weight,
                                     # double-buffered, on v5e/v6e/v7x alike.
    )

    x_spec = pl.BlockSpec((br, bc), lambda i, j: (i, j))
    o_spec = pl.BlockSpec((br, bc), lambda i, j: (i, j))
    out_shape = jax.ShapeDtypeStruct((rows, hw), x2d.dtype)
    io_alias = {0: 0} if donate_x else {}

    if num_parameters == 1:
        # Pre-fold 1/post_stdv into the slope; keep it f32 in SMEM.
        w_smem = weight.astype(jnp.float32) * inv_post_stdv
        kernel = functools.partial(
            _cprelu_scalar_kernel, pos_scale=inv_post_stdv, bias=bias)
        out = pl.pallas_call(
            kernel,
            out_shape=out_shape,
            grid=grid,
            in_specs=[
                x_spec,
                pl.BlockSpec(memory_space=pltpu.MemorySpace.SMEM),
            ],
            out_specs=o_spec,
            compiler_params=cparams,
            cost_estimate=cost,
            input_output_aliases=io_alias,
        )(x2d, w_smem)
    else:
        # Per-(batch, channel) slope column, pre-scaled by 1/post_stdv, f32.
        w_col = (jnp.tile(weight.astype(jnp.float32), (N,)) * inv_post_stdv
                 ).reshape(rows, 1)
        w_spec = pl.BlockSpec((br, 1), lambda i, j: (i, 0))
        kernel = functools.partial(
            _cprelu_col_kernel, pos_scale=inv_post_stdv, bias=bias)
        out = pl.pallas_call(
            kernel,
            out_shape=out_shape,
            grid=grid,
            in_specs=[x_spec, w_spec],
            out_specs=o_spec,
            compiler_params=cparams,
            cost_estimate=cost,
            input_output_aliases=io_alias,
        )(x2d, w_col)

    return out.reshape(N, C, H, W)


if __name__ == "__main__":
    key = jax.random.PRNGKey(0)
    init = 0.25
    post_mean = (1.0 - init) / math.sqrt(2.0 * math.pi)
    post_stdv = math.sqrt((1.0 + init ** 2) / 2.0 - post_mean ** 2)

    def ref_fn(x, w):
        C = x.shape[1]
        w_b = w.reshape(1, C, 1, 1) if w.shape[0] == C else w.reshape(1, 1, 1, 1)
        return (jnp.where(x >= 0, x, x * w_b) - post_mean) / post_stdv

    # Aligned case: (2, 4, 16, 16), per-channel and single-parameter slopes.
    N, C, H, W = 2, 4, 16, 16
    kx, km = jax.random.split(key)
    x = jax.random.normal(kx, (N, C, H, W), dtype=jnp.float32)

    w_chan = jnp.array([0.25, 0.1, 0.5, 0.3], dtype=jnp.float32)
    y = jax.block_until_ready(cprelu(x, w_chan, init=init))
    assert jnp.allclose(y, ref_fn(x, w_chan), atol=1e-5, rtol=1e-5), \
        "per-channel mismatch"

    w1 = jnp.full((1,), init, dtype=jnp.float32)
    y1 = jax.block_until_ready(cprelu(x, w1, init=init))
    assert jnp.allclose(y1, ref_fn(x, w1), atol=1e-5, rtol=1e-5), \
        "scalar mismatch"

    # Misaligned case (rows=6, H*W=196): exercises the ragged last block
    # (no host-side pad/slice passes; overhang reads are junk, masked on store).
    x_m = jax.random.normal(km, (2, 3, 14, 14), dtype=jnp.float32)
    w_m = jnp.array([0.2, 0.4, 0.6], dtype=jnp.float32)
    y_m = jax.block_until_ready(cprelu(x_m, w_m, init=init))
    assert jnp.allclose(y_m, ref_fn(x_m, w_m), atol=1e-5, rtol=1e-5), \
        "misaligned mismatch"

    print("KERNEL_OK")
</pallas_src>

<mosaic_0001>
module attributes {stable_mosaic.version = 11 : i64} {
  func.func @_cprelu_col_kernel(%arg0: i32, %arg1: i32, %arg2: memref<8x256xf32, #tpu.memory_space<vmem>>, %arg3: memref<8x1xf32, #tpu.memory_space<vmem>>, %arg4: memref<8x256xf32, #tpu.memory_space<vmem>>) attributes {dimension_semantics = [#tpu.dimension_semantics<parallel>, #tpu.dimension_semantics<parallel>], iteration_bounds = array<i64: 1, 1>, scalar_prefetch = 0 : i64, scratch_operands = 0 : i64, tpu.core_type = #tpu.core_type<tc>, window_params = [{transform_indices = @transform_0, window_bounds = array<i64: 8, 256>}, {transform_indices = @transform_1, window_bounds = array<i64: 8, 1>}, {transform_indices = @transform_2, window_bounds = array<i64: 8, 256>}]} {
    %c0 = arith.constant 0 : index
    %c0_0 = arith.constant 0 : index
    %0 = vector.load %arg2[%c0, %c0_0] : memref<8x256xf32, #tpu.memory_space<vmem>>, vector<8x256xf32>
    %cst = arith.constant 0.000000e+00 : f32
    %1 = vector.broadcast %cst : f32 to vector<8x256xf32>
    %2 = arith.cmpf oge, %0, %1 : vector<8x256xf32>
    %c0_1 = arith.constant 0 : index
    %c0_2 = arith.constant 0 : index
    %3 = vector.load %arg3[%c0_1, %c0_2] : memref<8x1xf32, #tpu.memory_space<vmem>>, vector<8x1xf32>
    %cst_3 = arith.constant 1.50460958 : f32
    %4 = vector.broadcast %cst_3 : f32 to vector<8x256xf32>
    %5 = vector.shape_cast %3 : vector<8x1xf32> to vector<8x1xf32>
    %6 = vector.broadcast %5 : vector<8x1xf32> to vector<8x256xf32>
    %7 = arith.select %2, %4, %6 : vector<8x256xi1>, vector<8x256xf32>
    %8 = arith.mulf %0, %7 : vector<8x256xf32>
    %cst_4 = arith.constant 0.450189292 : f32
    %9 = vector.broadcast %cst_4 : f32 to vector<8x256xf32>
    %10 = arith.subf %8, %9 : vector<8x256xf32>
    %c0_5 = arith.constant 0 : index
    %c0_6 = arith.constant 0 : index
    %11 = vector.load %arg4[%c0_5, %c0_6] : memref<8x256xf32, #tpu.memory_space<vmem>>, vector<8x256xf32>
    tpu.vector_store %arg4[%c0_5, %c0_6], %10 {strides = array<i32>} : memref<8x256xf32, #tpu.memory_space<vmem>>, vector<8x256xf32>,
    return
  }
  func.func @transform_0(%arg0: i32, %arg1: i32) -> (i32, i32) {
    %c0_i32 = arith.constant 0 : i32
    return %arg0, %arg1 : i32, i32
  }
  func.func @transform_1(%arg0: i32, %arg1: i32) -> (i32, i32) {
    %c0_i32 = arith.constant 0 : i32
    %c0_i32_0 = arith.constant 0 : i32
    return %arg0, %c0_i32 : i32, i32
  }
  func.func @transform_2(%arg0: i32, %arg1: i32) -> (i32, i32) {
    %c0_i32 = arith.constant 0 : i32
    return %arg0, %arg1 : i32, i32
  }
}

</mosaic_0001>

<llo_original>
// kernel: tpu_custom_call.1
$region0: #{tpu_custom_call.1}
  #allocation0 [shape = 'u32[]', space=smem, size = 0x4, offset = 0x4, fixed_abs, tag = 'smem constant byte address 0x4 - core index']
  #allocation1 [shape = 'u32[144,128]{1,0:T(1,128)}', space=vmem, size = 0x12000, scoped, tag = 'internal scratch']
  %s0 = inlined_call_operand.hbm [shape: f32[8,256], index: 0, kind: input, shape index: {}]
  %s1 = inlined_call_operand.vmem [shape: f32[8,1], index: 1, kind: input, shape index: {}]
  %s2 = inlined_call_operand.hbm [shape: f32[8,256], index: 2, kind: output, shape index: {}]
  %s3 = sld [smem:[#allocation0]]
  $region22: #{tpu_custom_call.1} parent=0
    _
  %s5 = ssub.s32 1, %s3
  %s6 = scalar_select 0, %s5, %s3
  $region1: #{tpu_custom_call.1} parent=0
    #allocation2 [shape = 'u8[8192]{0}', space=vmem, size = 0x2000, scoped, tag = 'input window, operand 0, single buffered']
    #allocation3 [shape = 's32[1]{0}', space=sflag, size = 0x4, scoped, tag = 'scoped memory for tpu_custom_call.1']
    #allocation4 [shape = 's32[1]{0}', space=sflag, size = 0x4, scoped, tag = 'scoped memory for tpu_custom_call.1']
    #allocation5 [shape = 'u8[8192]{0}', space=vmem, size = 0x2000, scoped, tag = 'output window, operand 0, single buffered']
    %7 = vsyncpa [#allocation3], 0
    %8 = vsyncpa [#allocation4], 0
    // Predicated region
    $region2: #{tpu_custom_call.1} parent=1 // pred_check
      _
    $region3: #{tpu_custom_call.1} parent=1 // pred_check_branch
      %10 = sbr.rel (0) target = $region5
    $region4: #{tpu_custom_call.1} parent=1 // pred_region
      %s12 = ssub.s32 256, 256
      %13 = vsyncadd [#allocation3], %s12
      %s15 = sshll.u32 [#allocation2], 4
      %s16 = int_to_ptr.vmem [resolvable:$true] %s15
      %18 = dma.hbm_to_vmem [thread:$0]  %s0, 256, %s16, [#allocation3]
    $region5: #{tpu_custom_call.1} parent=1 // pred_fallthru
      _
    // Predicated region
    $region6: #{tpu_custom_call.1} parent=1 // pred_check
      _
    $region7: #{tpu_custom_call.1} parent=1 // pred_check_branch
      %20 = sbr.rel (0) target = $region9
    $region8: #{tpu_custom_call.1} parent=1 // pred_region
      _
    $region9: #{tpu_custom_call.1} parent=1 // pred_fallthru
      _
    // Predicated region
    $region10: #{tpu_custom_call.1} parent=1 // pred_check
      _
    $region11: #{tpu_custom_call.1} parent=1 // pred_check_branch
      %22 = sbr.rel (0) target = $region13
    $region12: #{tpu_custom_call.1} parent=1 // pred_region
      %23 = dma.done [#allocation3], 256
    $region13: #{tpu_custom_call.1} parent=1 // pred_fallthru
      _
    %v24 = vld [vmem:[#allocation2] sm:$0xff]
    %v25 = vld [vmem:[#allocation2 + $0x8] sm:$0xff]
    %vm26 = vcmp.ge.f32.partialorder %v24, 0.0
    %vm27 = vcmp.ge.f32.partialorder %v25, 0.0
    %v28 = vld [vmem:[%s1] sm:$0xff]
    %30 = vset.pattern.permute.xlu0 0
    %31 = vperm.xlu0 %30, %v28
    %v32 = vpop.permute.xlu0 %31
    %v34 = vsel %vm26, 1.5046096, %v32
    %v35 = vsel %vm27, 1.5046096, %v32
    %v36 = vmul.f32 %v24, %v34
    %v37 = vmul.f32 %v25, %v35
    %v38 = vsub.f32 %v36, 0.4501893
    %v39 = vsub.f32 %v37, 0.4501893
    %40 = vst [vmem:[#allocation5] sm:$0xff] %v38
    %41 = vst [vmem:[#allocation5 + $0x8] sm:$0xff] %v39
    // Predicated region
    $region14: #{tpu_custom_call.1} parent=1 // pred_check
      _
    $region15: #{tpu_custom_call.1} parent=1 // pred_check_branch
      %43 = sbr.rel (0) target = $region17
    $region16: #{tpu_custom_call.1} parent=1 // pred_region
      %s45 = ssub.s32 256, 256
      %46 = vsyncadd [#allocation4], %s45
      %s48 = sshll.u32 [#allocation5], 4
      %s49 = int_to_ptr.vmem [resolvable:$true] %s48
      %51 = dma.vmem_to_hbm [thread:$0]  %s49, 256, %s2, [#allocation4]
    $region17: #{tpu_custom_call.1} parent=1 // pred_fallthru
      _
    // Predicated region
    $region18: #{tpu_custom_call.1} parent=1 // pred_check
      _
    $region19: #{tpu_custom_call.1} parent=1 // pred_check_branch
      %53 = sbr.rel (0) target = $region21
    $region20: #{tpu_custom_call.1} parent=1 // pred_region
      %54 = dma.done [#allocation4], 256
    $region21: #{tpu_custom_call.1} parent=1 // pred_fallthru
      _
    %55 = vsyncpa [#allocation3], 1
    %56 = vsyncpa [#allocation4], 1

</llo_original>
